<compile_context>
chip_gen: v7x
topology: tpu7x:2x2x1
jax: 0.10.0
libtpu: 0.0.40
codegen_flags: <defaults>
</compile_context>

<pallas_src>
import jax
import jax.numpy as jnp
from jax.experimental import pallas as pl
from jax.experimental.pallas import tpu as pltpu


def _channel_weight_kernel(x_ref, w_ref, o_ref):
    # x_ref: (R, T) activation tile (input dtype)
    # w_ref: (R, 1) or (1, T) float32 weight tile (broadcasts against x)
    # o_ref: (R, T) output tile (input dtype)
    x_f32 = x_ref[...].astype(jnp.float32)                  # x.float()
    o_ref[...] = (w_ref[...] * x_f32).astype(o_ref.dtype)   # weight * x, .type_as(x)


_MAX_ROW_TILE = 256   # multiple of 8/16/32 -> legal sublane tile for any dtype
_LANE = 128


def _chip_config():
    """Returns (target activation-block bytes, scoped-VMEM limit bytes, two_cores)."""
    try:
        kind = jax.devices()[0].device_kind.lower()
    except Exception:
        kind = ""
    if "7x" in kind or "v7" in kind:
        # v7x: ~3.2 TB/s HBM per TC, 64 MiB physical VMEM, 2 TensorCores.
        # Bigger blocks amortize grid-step overhead; raise the scoped limit.
        return 2 << 20, 40 << 20, True
    if "v6" in kind:
        # v6e: ~1.4 TB/s HBM, 128 MiB VMEM -> 2 MiB blocks, generous limit.
        return 2 << 20, 64 << 20, False
    # v5e and unknown chips: 1 MiB blocks are already ~85% of roofline at
    # 0.82 TB/s; keep VMEM demand modest but above the 16 MiB default.
    return 1 << 20, 48 << 20, False


def _pick_tiles(rows, cols, itemsize, target_bytes, two_cores):
    """Pick (R, T) so R*T*itemsize ~= target_bytes, T lane-dense (x128) or full."""
    R = rows if rows <= _MAX_ROW_TILE else _MAX_ROW_TILE
    if cols <= _LANE:
        T = cols                                            # tiny lane dim: full extent
    else:
        t = (target_bytes // (R * itemsize)) // _LANE * _LANE
        T = max(_LANE, t)
        if T >= cols:
            T = cols                                        # single full-extent col tile
    # v7x megacore: if everything fits in one block but the block is large
    # enough to be worth sharing, split columns so both TensorCores get work.
    if two_cores and R >= rows and T >= cols and cols >= 2 * _LANE:
        half = pl.cdiv(pl.cdiv(cols, 2), _LANE) * _LANE
        if half < cols and R * half * itemsize >= (256 << 10):
            T = half
    return R, T


def channel_weight(x, weight):
    """x: (N, C, H, W) float dtype; weight: (1, C, 1, 1)."""
    N, C, H, W = x.shape
    HW = H * W
    w_c = weight.astype(jnp.float32).reshape(C)

    target_bytes, vmem_limit, two_cores = _chip_config()
    itemsize = jnp.dtype(x.dtype).itemsize

    if HW >= _LANE:
        # Layout A (default): rows = N*C, lanes = H*W.  Weight is an (N*C, 1)
        # f32 column; its index_map depends only on the row axis so it is not
        # re-streamed per column tile (weight traffic stays O(N*C) bytes).
        rows, cols = N * C, HW
        x2d = x.reshape(rows, cols)
        w2d = jnp.broadcast_to(w_c.reshape(1, C), (N, C)).reshape(rows, 1)
        def make_w_spec(R, T):
            return pl.BlockSpec((R, 1), lambda r, t: (r, 0))
    else:
        # Layout B (small-spatial fallback): rows = N, lanes = C*H*W so output
        # stores stay lane-dense even when H*W < 128 (avoids masked vst.msk).
        # Weight is a (1, C*H*W) f32 row; index_map depends only on columns.
        rows, cols = N, C * HW
        x2d = x.reshape(rows, cols)
        w2d = jnp.broadcast_to(w_c.reshape(C, 1), (C, HW)).reshape(1, cols)
        def make_w_spec(R, T):
            return pl.BlockSpec((1, T), lambda r, t: (0, t))

    R, T = _pick_tiles(rows, cols, itemsize, target_bytes, two_cores)
    grid = (pl.cdiv(rows, R), pl.cdiv(cols, T))

    cost = pl.CostEstimate(
        flops=rows * cols,
        transcendentals=0,
        bytes_accessed=2 * rows * cols * itemsize + int(w2d.size) * 4,
    )

    out2d = pl.pallas_call(
        _channel_weight_kernel,
        out_shape=jax.ShapeDtypeStruct((rows, cols), x.dtype),
        grid_spec=pltpu.PrefetchScalarGridSpec(
            num_scalar_prefetch=0,
            grid=grid,
            in_specs=[
                pl.BlockSpec((R, T), lambda r, t: (r, t)),   # activations
                make_w_spec(R, T),                           # weights
            ],
            out_specs=pl.BlockSpec((R, T), lambda r, t: (r, t)),
        ),
        compiler_params=pltpu.CompilerParams(
            dimension_semantics=("parallel", "parallel"),
            vmem_limit_bytes=vmem_limit,
        ),
        cost_estimate=cost,
    )(x2d, w2d)

    return out2d.reshape(N, C, H, W)


def _reference(x, weight):
    return (weight.astype(jnp.float32) * x.astype(jnp.float32)).astype(x.dtype)


if __name__ == "__main__":
    key = jax.random.PRNGKey(0)
    k1, k2, k3 = jax.random.split(key, 3)

    # 1) Primary small test matching the module: batch=2, channels=4, 16x16.
    N, C, H, W = 2, 4, 16, 16
    scale = 1.0
    weight = jnp.ones((1, C, 1, 1), dtype=jnp.float32) * scale   # ones * scale init
    x = jax.random.normal(k1, (N, C, H, W), dtype=jnp.float32)
    y = jax.block_until_ready(channel_weight(x, weight))
    assert y.shape == x.shape and y.dtype == x.dtype
    assert jnp.allclose(y, _reference(x, weight), atol=1e-6, rtol=1e-6)

    # 2) Non-trivial weights + bf16 input (exercises f32 upcast / downcast path).
    w2 = jnp.arange(C, dtype=jnp.float32).reshape(1, C, 1, 1) * 0.25 + 0.5
    x_bf16 = jax.random.normal(k2, (N, C, H, W), dtype=jnp.float32).astype(jnp.bfloat16)
    y_bf16 = jax.block_until_ready(channel_weight(x_bf16, w2))
    ref_bf16 = _reference(x_bf16, w2)
    assert y_bf16.dtype == jnp.bfloat16
    assert jnp.allclose(y_bf16.astype(jnp.float32), ref_bf16.astype(jnp.float32),
                        atol=1e-2, rtol=1e-2)

    # 3) Small spatial map (H*W < 128) -> lane-dense fallback layout B.
    N3, C3, H3, W3 = 2, 4, 7, 7
    w3 = jnp.arange(C3, dtype=jnp.float32).reshape(1, C3, 1, 1) * 0.5 - 0.25
    x3 = jax.random.normal(k3, (N3, C3, H3, W3), dtype=jnp.float32)
    y3 = jax.block_until_ready(channel_weight(x3, w3))
    assert jnp.allclose(y3, _reference(x3, w3), atol=1e-6, rtol=1e-6)

    # 4) Many channels -> multi-block row grid with a masked row-edge block.
    N4, C4, H4, W4 = 2, 160, 12, 12    # rows = 320 > 256 -> grid (2, ...) on rows
    w4 = (jnp.arange(C4, dtype=jnp.float32).reshape(1, C4, 1, 1) % 5) * 0.3 + 0.1
    x4 = jax.random.normal(k1, (N4, C4, H4, W4), dtype=jnp.float32)
    y4 = jax.block_until_ready(channel_weight(x4, w4))
    assert jnp.allclose(y4, _reference(x4, w4), atol=1e-6, rtol=1e-6)

    print("KERNEL_OK")
</pallas_src>

<mosaic_0001>
module attributes {stable_mosaic.version = 11 : i64} {
  func.func @_channel_weight_kernel(%arg0: i32, %arg1: i32, %arg2: memref<8x256xf32, #tpu.memory_space<vmem>>, %arg3: memref<8x1xf32, #tpu.memory_space<vmem>>, %arg4: memref<8x256xf32, #tpu.memory_space<vmem>>) attributes {dimension_semantics = [#tpu.dimension_semantics<parallel>, #tpu.dimension_semantics<parallel>], iteration_bounds = array<i64: 1, 1>, scalar_prefetch = 0 : i64, scratch_operands = 0 : i64, tpu.core_type = #tpu.core_type<tc>, window_params = [{transform_indices = @transform_0, window_bounds = array<i64: 8, 256>}, {transform_indices = @transform_1, window_bounds = array<i64: 8, 1>}, {transform_indices = @transform_2, window_bounds = array<i64: 8, 256>}]} {
    %c0 = arith.constant 0 : index
    %c0_0 = arith.constant 0 : index
    %0 = vector.load %arg2[%c0, %c0_0] : memref<8x256xf32, #tpu.memory_space<vmem>>, vector<8x256xf32>
    %c0_1 = arith.constant 0 : index
    %c0_2 = arith.constant 0 : index
    %1 = vector.load %arg3[%c0_1, %c0_2] : memref<8x1xf32, #tpu.memory_space<vmem>>, vector<8x1xf32>
    %2 = vector.broadcast %1 : vector<8x1xf32> to vector<8x256xf32>
    %3 = arith.mulf %2, %0 : vector<8x256xf32>
    %c0_3 = arith.constant 0 : index
    %c0_4 = arith.constant 0 : index
    %4 = vector.load %arg4[%c0_3, %c0_4] : memref<8x256xf32, #tpu.memory_space<vmem>>, vector<8x256xf32>
    tpu.vector_store %arg4[%c0_3, %c0_4], %3 {strides = array<i32>} : memref<8x256xf32, #tpu.memory_space<vmem>>, vector<8x256xf32>,
    return
  }
  func.func @transform_0(%arg0: i32, %arg1: i32) -> (i32, i32) {
    %c0_i32 = arith.constant 0 : i32
    return %arg0, %arg1 : i32, i32
  }
  func.func @transform_1(%arg0: i32, %arg1: i32) -> (i32, i32) {
    %c0_i32 = arith.constant 0 : i32
    %c0_i32_0 = arith.constant 0 : i32
    return %arg0, %c0_i32 : i32, i32
  }
  func.func @transform_2(%arg0: i32, %arg1: i32) -> (i32, i32) {
    %c0_i32 = arith.constant 0 : i32
    return %arg0, %arg1 : i32, i32
  }
}

</mosaic_0001>

<llo_original>
// kernel: tpu_custom_call.1
$region0: #{tpu_custom_call.1}
  #allocation0 [shape = 'u32[]', space=smem, size = 0x4, offset = 0x4, fixed_abs, tag = 'smem constant byte address 0x4 - core index']
  #allocation1 [shape = 'u32[144,128]{1,0:T(1,128)}', space=vmem, size = 0x12000, scoped, tag = 'internal scratch']
  %s0 = inlined_call_operand.hbm [shape: f32[8,256], index: 0, kind: input, shape index: {}]
  %s1 = inlined_call_operand.vmem [shape: f32[8,1], index: 1, kind: input, shape index: {}]
  %s2 = inlined_call_operand.hbm [shape: f32[8,256], index: 2, kind: output, shape index: {}]
  %s3 = sld [smem:[#allocation0]]
  $region22: #{tpu_custom_call.1} parent=0
    _
  %s5 = ssub.s32 1, %s3
  %s6 = scalar_select 0, %s5, %s3
  $region1: #{tpu_custom_call.1} parent=0
    #allocation2 [shape = 'u8[8192]{0}', space=vmem, size = 0x2000, scoped, tag = 'input window, operand 0, single buffered']
    #allocation3 [shape = 's32[1]{0}', space=sflag, size = 0x4, scoped, tag = 'scoped memory for tpu_custom_call.1']
    #allocation4 [shape = 's32[1]{0}', space=sflag, size = 0x4, scoped, tag = 'scoped memory for tpu_custom_call.1']
    #allocation5 [shape = 'u8[8192]{0}', space=vmem, size = 0x2000, scoped, tag = 'output window, operand 0, single buffered']
    %7 = vsyncpa [#allocation3], 0
    %8 = vsyncpa [#allocation4], 0
    // Predicated region
    $region2: #{tpu_custom_call.1} parent=1 // pred_check
      _
    $region3: #{tpu_custom_call.1} parent=1 // pred_check_branch
      %10 = sbr.rel (0) target = $region5
    $region4: #{tpu_custom_call.1} parent=1 // pred_region
      %s12 = ssub.s32 256, 256
      %13 = vsyncadd [#allocation3], %s12
      %s15 = sshll.u32 [#allocation2], 4
      %s16 = int_to_ptr.vmem [resolvable:$true] %s15
      %18 = dma.hbm_to_vmem [thread:$0]  %s0, 256, %s16, [#allocation3]
    $region5: #{tpu_custom_call.1} parent=1 // pred_fallthru
      _
    // Predicated region
    $region6: #{tpu_custom_call.1} parent=1 // pred_check
      _
    $region7: #{tpu_custom_call.1} parent=1 // pred_check_branch
      %20 = sbr.rel (0) target = $region9
    $region8: #{tpu_custom_call.1} parent=1 // pred_region
      _
    $region9: #{tpu_custom_call.1} parent=1 // pred_fallthru
      _
    // Predicated region
    $region10: #{tpu_custom_call.1} parent=1 // pred_check
      _
    $region11: #{tpu_custom_call.1} parent=1 // pred_check_branch
      %22 = sbr.rel (0) target = $region13
    $region12: #{tpu_custom_call.1} parent=1 // pred_region
      %23 = dma.done [#allocation3], 256
    $region13: #{tpu_custom_call.1} parent=1 // pred_fallthru
      _
    %v24 = vld [vmem:[#allocation2] sm:$0xff]
    %v25 = vld [vmem:[#allocation2 + $0x8] sm:$0xff]
    %v26 = vld [vmem:[%s1] sm:$0xff]
    %28 = vset.pattern.permute.xlu0 0
    %29 = vperm.xlu0 %28, %v26
    %v30 = vpop.permute.xlu0 %29
    %v32 = vmul.f32 %v30, %v24
    %v33 = vmul.f32 %v30, %v25
    %34 = vst [vmem:[#allocation5] sm:$0xff] %v32
    %35 = vst [vmem:[#allocation5 + $0x8] sm:$0xff] %v33
    // Predicated region
    $region14: #{tpu_custom_call.1} parent=1 // pred_check
      _
    $region15: #{tpu_custom_call.1} parent=1 // pred_check_branch
      %37 = sbr.rel (0) target = $region17
    $region16: #{tpu_custom_call.1} parent=1 // pred_region
      %s39 = ssub.s32 256, 256
      %40 = vsyncadd [#allocation4], %s39
      %s42 = sshll.u32 [#allocation5], 4
      %s43 = int_to_ptr.vmem [resolvable:$true] %s42
      %45 = dma.vmem_to_hbm [thread:$0]  %s43, 256, %s2, [#allocation4]
    $region17: #{tpu_custom_call.1} parent=1 // pred_fallthru
      _
    // Predicated region
    $region18: #{tpu_custom_call.1} parent=1 // pred_check
      _
    $region19: #{tpu_custom_call.1} parent=1 // pred_check_branch
      %47 = sbr.rel (0) target = $region21
    $region20: #{tpu_custom_call.1} parent=1 // pred_region
      %48 = dma.done [#allocation4], 256
    $region21: #{tpu_custom_call.1} parent=1 // pred_fallthru
      _
    %49 = vsyncpa [#allocation3], 1
    %50 = vsyncpa [#allocation4], 1

</llo_original>
